<compile_context>
chip_gen: v7x
topology: tpu7x:2x2x1
jax: 0.10.0
libtpu: 0.0.40
codegen_flags: <defaults>
</compile_context>

<pallas_src>
import jax
import jax.numpy as jnp
from jax import lax
from jax.experimental import pallas as pl
from jax.experimental.pallas import tpu as pltpu

NUM_BITS = 1
MOMENTUM = 0.1
QMIN = 0.0
QMAX = 2.0 ** NUM_BITS - 1.0

_LANES = 1024                     # lane-dense slab width for the elementwise pass
_VMEM_LIMIT = 32 * 1024 * 1024    # safe on v5e/v6e/v7x (v7x physical VMEM = 64 MiB)


def _round_up(x, m):
    return ((x + m - 1) // m) * m


# ----------------------------- kernels -------------------------------------


def _minmax_kernel(x_ref, min_ref, max_ref, min_acc, max_acc):
    """Tiled per-sample min/max over the flattened sample, then mean over batch."""
    j = pl.program_id(0)

    @pl.when(j == 0)
    def _():
        min_acc[...] = jnp.full(min_acc.shape, jnp.inf, dtype=min_acc.dtype)
        max_acc[...] = jnp.full(max_acc.shape, -jnp.inf, dtype=max_acc.dtype)

    x = x_ref[...].astype(jnp.float32)                          # (B, TILE_F)
    min_acc[...] = jnp.minimum(min_acc[...], jnp.min(x, axis=-1, keepdims=True))
    max_acc[...] = jnp.maximum(max_acc[...], jnp.max(x, axis=-1, keepdims=True))

    @pl.when(j == pl.num_programs(0) - 1)
    def _():
        inv_b = jnp.float32(1.0 / min_acc.shape[0])
        min_ref[...] = jnp.sum(min_acc[...], axis=0, keepdims=True) * inv_b
        max_ref[...] = jnp.sum(max_acc[...], axis=0, keepdims=True) * inv_b


def _quantize_kernel(min_ref, max_ref, seed_ref, x_ref, o_ref):
    """Elementwise uniform quantization of one (ROW_TILE, LANES) slab tile."""
    min_v = min_ref[0]
    max_v = max_ref[0]
    scale = jnp.maximum((max_v - min_v) * jnp.float32(1.0 / (QMAX - QMIN)),
                        jnp.float32(1e-8))
    inv_scale = jnp.float32(1.0) / scale          # one scalar divide per tile

    x = x_ref[...].astype(jnp.float32)
    q = (x - min_v) * inv_scale                   # qmin == 0 folded away

    # ---- deterministic counter-based uniform(-0.5, 0.5) noise -------------
    nrows, ncols = x_ref.shape
    row = lax.broadcasted_iota(jnp.int32, (nrows, ncols), 0)
    col = lax.broadcasted_iota(jnp.int32, (nrows, ncols), 1)
    base = pl.program_id(0) * jnp.int32(nrows * ncols)
    idx = base + row * jnp.int32(ncols) + col                 # global element id
    mixed_seed = seed_ref[0] * jnp.int32(-1640531527)         # seed * 0x9E3779B9 (wraps)
    h = lax.bitcast_convert_type(idx ^ mixed_seed, jnp.uint32)
    # murmur3 finalizer
    h = (h ^ (h >> 16)) * jnp.uint32(0x85EBCA6B)
    h = (h ^ (h >> 13)) * jnp.uint32(0xC2B2AE35)
    h = h ^ (h >> 16)
    # mantissa trick: bits -> float in [1, 2), shift to [-0.5, 0.5)
    fbits = (h >> 9) | jnp.uint32(0x3F800000)
    noise = lax.bitcast_convert_type(fbits, jnp.float32) - jnp.float32(1.5)

    q = jnp.round(jnp.clip(q + noise, jnp.float32(QMIN), jnp.float32(QMAX)))
    o_ref[...] = (q * scale + min_v).astype(o_ref.dtype)       # (q - qmin)*scale + min


# ----------------------------- wrappers -------------------------------------


def _batch_minmax(xf):
    """xf: (B, F) -> (min_value, max_value), each shaped (1, 1) float32."""
    b, f = xf.shape
    itemsize = jnp.dtype(xf.dtype).itemsize
    # reduction-axis tile: multiple of 128, block capped at ~2 MiB
    max_tile = max(128, ((2 * 1024 * 1024) // max(1, b * itemsize)) // 128 * 128)
    tile = max(128, min(_round_up(f, 128), max_tile, 4096))
    f_pad = _round_up(f, tile)
    if f_pad != f:
        # edge-replication padding cannot change per-row min/max
        xf = jnp.pad(xf, ((0, 0), (0, f_pad - f)), mode="edge")
    grid = (f_pad // tile,)

    return pl.pallas_call(
        _minmax_kernel,
        out_shape=(jax.ShapeDtypeStruct((1, 1), jnp.float32),
                   jax.ShapeDtypeStruct((1, 1), jnp.float32)),
        grid=grid,
        in_specs=[pl.BlockSpec((b, tile), lambda j: (0, j))],
        out_specs=(pl.BlockSpec((1, 1), lambda j: (0, 0)),
                   pl.BlockSpec((1, 1), lambda j: (0, 0))),
        scratch_shapes=[pltpu.VMEM((b, 1), jnp.float32),
                        pltpu.VMEM((b, 1), jnp.float32)],
        compiler_params=pltpu.CompilerParams(
            dimension_semantics=("arbitrary",),       # reduction axis
            vmem_limit_bytes=_VMEM_LIMIT),
    )(xf)


def _quantize(x_flat, min_v, max_v, seed, out_dtype):
    """x_flat: (total,) any float dtype; min_v/max_v: (1,) f32; seed: (1,) i32."""
    total = x_flat.shape[0]
    padded_total = _round_up(total, 8 * _LANES)
    if padded_total != total:
        x_flat = jnp.pad(x_flat, (0, padded_total - total))
    rows = padded_total // _LANES
    row_tile = 8
    for cand in (512, 256, 128, 64, 32, 16, 8):       # biggest divisor of rows
        if rows % cand == 0:
            row_tile = cand
            break
    slab = x_flat.reshape(rows, _LANES)
    grid = (rows // row_tile,)

    out = pl.pallas_call(
        _quantize_kernel,
        out_shape=jax.ShapeDtypeStruct((rows, _LANES), out_dtype),
        grid=grid,
        in_specs=[
            pl.BlockSpec(memory_space=pltpu.MemorySpace.SMEM),   # min_value
            pl.BlockSpec(memory_space=pltpu.MemorySpace.SMEM),   # max_value
            pl.BlockSpec(memory_space=pltpu.MemorySpace.SMEM),   # seed
            pl.BlockSpec((row_tile, _LANES), lambda i: (i, 0)),  # x slab tile
        ],
        out_specs=pl.BlockSpec((row_tile, _LANES), lambda i: (i, 0)),
        compiler_params=pltpu.CompilerParams(
            dimension_semantics=("parallel",),   # noise is counter-based, order-free
            vmem_limit_bytes=_VMEM_LIMIT),
    )(min_v, max_v, seed, slab)
    return out.reshape(padded_total)[:total]


def quant_measure_forward(x, running_min, running_max, *, training=True,
                          momentum=MOMENTUM, seed=0):
    """Forward of QuantMeasure. Returns (output, new_running_min, new_running_max)."""
    orig_shape = x.shape
    orig_dtype = x.dtype
    b = x.shape[0]
    xf = x.reshape(b, -1)          # keep the original dtype; widen inside kernels

    if training:
        mn, mx = _batch_minmax(xf)                  # (1,1) each, f32
        min_v = mn.reshape((1,))
        max_v = mx.reshape((1,))
        new_rmin = running_min * momentum + min_v * (1.0 - momentum)
        new_rmax = running_max * momentum + max_v * (1.0 - momentum)
    else:
        min_v = running_min.astype(jnp.float32).reshape((1,))
        max_v = running_max.astype(jnp.float32).reshape((1,))
        new_rmin, new_rmax = running_min, running_max

    seed_arr = jnp.asarray([seed], dtype=jnp.int32)
    y_flat = _quantize(x.reshape(-1), min_v, max_v, seed_arr, orig_dtype)
    return y_flat.reshape(orig_shape), new_rmin, new_rmax


# ------------------------------- main ---------------------------------------

if __name__ == "__main__":
    key = jax.random.PRNGKey(0)
    x = jax.random.normal(key, (2, 4, 16, 16), dtype=jnp.float32)  # NCHW

    # buffers registered in __init__ (torch.zeros(1))
    running_min = jnp.zeros((1,), jnp.float32)
    running_max = jnp.zeros((1,), jnp.float32)

    y, new_rmin, new_rmax = quant_measure_forward(
        x, running_min, running_max, training=True, seed=0)
    y = jax.block_until_ready(y)
    jax.block_until_ready((new_rmin, new_rmax))

    assert y.shape == x.shape and y.dtype == x.dtype

    # check the batch min/max statistics against a pure-JAX reference
    xf_ref = x.reshape(x.shape[0], -1)
    ref_min = jnp.min(xf_ref, axis=-1).mean()
    ref_max = jnp.max(xf_ref, axis=-1).mean()
    assert jnp.allclose(new_rmin, ref_min * (1.0 - MOMENTUM), rtol=1e-5, atol=1e-5)
    assert jnp.allclose(new_rmax, ref_max * (1.0 - MOMENTUM), rtol=1e-5, atol=1e-5)

    # with num_bits=1 the output can only take 2 quantization levels
    n_levels = int(jnp.unique(jnp.round(y.reshape(-1) * 1e4) / 1e4).shape[0])
    assert n_levels <= 2 ** NUM_BITS, n_levels

    print("KERNEL_OK")
</pallas_src>

<mosaic_0001>
module attributes {stable_mosaic.version = 11 : i64} {
  func.func @_minmax_kernel(%arg0: i32, %arg1: memref<2x1024xf32, #tpu.memory_space<vmem>>, %arg2: memref<1x1xf32, #tpu.memory_space<vmem>>, %arg3: memref<1x1xf32, #tpu.memory_space<vmem>>, %arg4: memref<2x1xf32, #tpu.memory_space<vmem>>, %arg5: memref<2x1xf32, #tpu.memory_space<vmem>>) attributes {dimension_semantics = [#tpu.dimension_semantics<arbitrary>], iteration_bounds = array<i64: 1>, scalar_prefetch = 0 : i64, scratch_operands = 2 : i64, tpu.core_type = #tpu.core_type<tc>, window_params = [{transform_indices = @transform_0, window_bounds = array<i64: 2, 1024>}, {pipeline_mode = #tpu.pipeline_mode<synchronous>, transform_indices = @transform_1, window_bounds = array<i64: 1, 1>}, {pipeline_mode = #tpu.pipeline_mode<synchronous>, transform_indices = @transform_2, window_bounds = array<i64: 1, 1>}]} {
    %c0_i32 = arith.constant 0 : i32
    %0 = arith.cmpi eq, %arg0, %c0_i32 : i32
    %1 = arith.extui %0 : i1 to i32
    %c0_i32_0 = arith.constant 0 : i32
    %2 = arith.cmpi ne, %1, %c0_i32_0 : i32
    scf.if %2 {
      %cst_13 = arith.constant 0x7F800000 : f32
      %17 = vector.broadcast %cst_13 : f32 to vector<2x1xf32>
      %c0_14 = arith.constant 0 : index
      %c0_15 = arith.constant 0 : index
      %18 = vector.load %arg4[%c0_14, %c0_15] : memref<2x1xf32, #tpu.memory_space<vmem>>, vector<2x1xf32>
      tpu.vector_store %arg4[%c0_14, %c0_15], %17 {strides = array<i32>} : memref<2x1xf32, #tpu.memory_space<vmem>>, vector<2x1xf32>,
      %cst_16 = arith.constant 0xFF800000 : f32
      %19 = vector.broadcast %cst_16 : f32 to vector<2x1xf32>
      %c0_17 = arith.constant 0 : index
      %c0_18 = arith.constant 0 : index
      %20 = vector.load %arg5[%c0_17, %c0_18] : memref<2x1xf32, #tpu.memory_space<vmem>>, vector<2x1xf32>
      tpu.vector_store %arg5[%c0_17, %c0_18], %19 {strides = array<i32>} : memref<2x1xf32, #tpu.memory_space<vmem>>, vector<2x1xf32>,
    } else {
    }
    %c0 = arith.constant 0 : index
    %c0_1 = arith.constant 0 : index
    %3 = vector.load %arg1[%c0, %c0_1] : memref<2x1024xf32, #tpu.memory_space<vmem>>, vector<2x1024xf32>
    %c0_2 = arith.constant 0 : index
    %c0_3 = arith.constant 0 : index
    %4 = vector.load %arg4[%c0_2, %c0_3] : memref<2x1xf32, #tpu.memory_space<vmem>>, vector<2x1xf32>
    %cst = arith.constant dense<0x7F800000> : vector<2xf32>
    %5 = vector.multi_reduction <minimumf>, %3, %cst [1] : vector<2x1024xf32> to vector<2xf32>
    %6 = vector.shape_cast %5 : vector<2xf32> to vector<2x1xf32>
    %7 = arith.minimumf %4, %6 : vector<2x1xf32>
    %c0_4 = arith.constant 0 : index
    %c0_5 = arith.constant 0 : index
    %8 = vector.load %arg4[%c0_4, %c0_5] : memref<2x1xf32, #tpu.memory_space<vmem>>, vector<2x1xf32>
    tpu.vector_store %arg4[%c0_4, %c0_5], %7 {strides = array<i32>} : memref<2x1xf32, #tpu.memory_space<vmem>>, vector<2x1xf32>,
    %c0_6 = arith.constant 0 : index
    %c0_7 = arith.constant 0 : index
    %9 = vector.load %arg5[%c0_6, %c0_7] : memref<2x1xf32, #tpu.memory_space<vmem>>, vector<2x1xf32>
    %cst_8 = arith.constant dense<0xFF800000> : vector<2xf32>
    %10 = vector.multi_reduction <maximumf>, %3, %cst_8 [1] : vector<2x1024xf32> to vector<2xf32>
    %11 = vector.shape_cast %10 : vector<2xf32> to vector<2x1xf32>
    %12 = arith.maximumf %9, %11 : vector<2x1xf32>
    %c0_9 = arith.constant 0 : index
    %c0_10 = arith.constant 0 : index
    %13 = vector.load %arg5[%c0_9, %c0_10] : memref<2x1xf32, #tpu.memory_space<vmem>>, vector<2x1xf32>
    tpu.vector_store %arg5[%c0_9, %c0_10], %12 {strides = array<i32>} : memref<2x1xf32, #tpu.memory_space<vmem>>, vector<2x1xf32>,
    %c0_i32_11 = arith.constant 0 : i32
    %14 = arith.cmpi eq, %arg0, %c0_i32_11 : i32
    %15 = arith.extui %14 : i1 to i32
    %c0_i32_12 = arith.constant 0 : i32
    %16 = arith.cmpi ne, %15, %c0_i32_12 : i32
    scf.if %16 {
      %c0_13 = arith.constant 0 : index
      %c0_14 = arith.constant 0 : index
      %17 = vector.load %arg4[%c0_13, %c0_14] : memref<2x1xf32, #tpu.memory_space<vmem>>, vector<2x1xf32>
      %cst_15 = arith.constant dense<0.000000e+00> : vector<1xf32>
      %18 = vector.multi_reduction <add>, %17, %cst_15 [0] : vector<2x1xf32> to vector<1xf32>
      %19 = vector.shape_cast %18 : vector<1xf32> to vector<1x1xf32>
      %cst_16 = arith.constant 5.000000e-01 : f32
      %20 = vector.broadcast %cst_16 : f32 to vector<1x1xf32>
      %21 = arith.mulf %19, %20 : vector<1x1xf32>
      %c0_17 = arith.constant 0 : index
      %c0_18 = arith.constant 0 : index
      %22 = vector.load %arg2[%c0_17, %c0_18] : memref<1x1xf32, #tpu.memory_space<vmem>>, vector<1x1xf32>
      tpu.vector_store %arg2[%c0_17, %c0_18], %21 {strides = array<i32>} : memref<1x1xf32, #tpu.memory_space<vmem>>, vector<1x1xf32>,
      %c0_19 = arith.constant 0 : index
      %c0_20 = arith.constant 0 : index
      %23 = vector.load %arg5[%c0_19, %c0_20] : memref<2x1xf32, #tpu.memory_space<vmem>>, vector<2x1xf32>
      %cst_21 = arith.constant dense<0.000000e+00> : vector<1xf32>
      %24 = vector.multi_reduction <add>, %23, %cst_21 [0] : vector<2x1xf32> to vector<1xf32>
      %25 = vector.shape_cast %24 : vector<1xf32> to vector<1x1xf32>
      %cst_22 = arith.constant 5.000000e-01 : f32
      %26 = vector.broadcast %cst_22 : f32 to vector<1x1xf32>
      %27 = arith.mulf %25, %26 : vector<1x1xf32>
      %c0_23 = arith.constant 0 : index
      %c0_24 = arith.constant 0 : index
      %28 = vector.load %arg3[%c0_23, %c0_24] : memref<1x1xf32, #tpu.memory_space<vmem>>, vector<1x1xf32>
      tpu.vector_store %arg3[%c0_23, %c0_24], %27 {strides = array<i32>} : memref<1x1xf32, #tpu.memory_space<vmem>>, vector<1x1xf32>,
    } else {
    }
    return
  }
  func.func @transform_0(%arg0: i32) -> (i32, i32) {
    %c0_i32 = arith.constant 0 : i32
    %c0_i32_0 = arith.constant 0 : i32
    return %c0_i32, %arg0 : i32, i32
  }
  func.func @transform_1(%arg0: i32) -> (i32, i32) {
    %c0_i32 = arith.constant 0 : i32
    %c0_i32_0 = arith.constant 0 : i32
    %c0_i32_1 = arith.constant 0 : i32
    return %c0_i32, %c0_i32_0 : i32, i32
  }
  func.func @transform_2(%arg0: i32) -> (i32, i32) {
    %c0_i32 = arith.constant 0 : i32
    %c0_i32_0 = arith.constant 0 : i32
    %c0_i32_1 = arith.constant 0 : i32
    return %c0_i32, %c0_i32_0 : i32, i32
  }
}

</mosaic_0001>

<llo_original>
// kernel: tpu_custom_call.1
$region0: #{tpu_custom_call.1}
  #allocation0 [shape = 'u32[]', space=smem, size = 0x4, offset = 0x4, fixed_abs, tag = 'smem constant byte address 0x4 - core index']
  #allocation1 [shape = 'u32[144,128]{1,0:T(1,128)}', space=vmem, size = 0x12000, scoped, tag = 'internal scratch']
  #allocation2 [shape = 'f32[2,1]{1,0:T(2,128)}', space=vmem, size = 0x400, scoped, tag = 'scratch operand']
  #allocation3 [shape = 'f32[2,1]{1,0:T(2,128)}', space=vmem, size = 0x400, scoped, tag = 'scratch operand']
  %s0 = inlined_call_operand.hbm [shape: f32[2,1024], index: 0, kind: input, shape index: {}]
  %s1 = inlined_call_operand.hbm [shape: f32[1,1], index: 1, kind: output, shape index: {0}]
  %s2 = inlined_call_operand.hbm [shape: f32[1,1], index: 2, kind: output, shape index: {1}]
  %3 = xla_tuple %s1, %s2
  %s4 = sld [smem:[#allocation0]]
  $region34: #{tpu_custom_call.1} parent=0
    _
  %s6 = ssub.s32 1, %s4
  %s7 = scalar_select 0, %s6, %s4
  $region1: #{tpu_custom_call.1} parent=0
    #allocation4 [shape = 'u8[8192]{0}', space=vmem, size = 0x2000, scoped, tag = 'input window, operand 0, single buffered']
    #allocation5 [shape = 's32[1]{0}', space=sflag, size = 0x4, scoped, tag = 'scoped memory for tpu_custom_call.1']
    #allocation6 [shape = 's32[1]{0}', space=sflag, size = 0x4, scoped, tag = 'scoped memory for tpu_custom_call.1']
    #allocation7 [shape = 'u8[512]{0}', space=vmem, size = 0x400, scoped, tag = 'output window, operand 0, single buffered']
    #allocation8 [shape = 'u8[512]{0}', space=vmem, size = 0x400, scoped, tag = 'output window, operand 1, single buffered']
    #allocation9 [shape = 's32[1]{0}', space=sflag, size = 0x4, scoped, tag = 'scoped memory for tpu_custom_call.1']
    %8 = vsyncpa [#allocation5], 0
    %9 = vsyncpa [#allocation6], 0
    %10 = vsyncpa [#allocation9], 0
    // Predicated region
    $region2: #{tpu_custom_call.1} parent=1 // pred_check
      _
    $region3: #{tpu_custom_call.1} parent=1 // pred_check_branch
      %12 = sbr.rel (0) target = $region5
    $region4: #{tpu_custom_call.1} parent=1 // pred_region
      %s14 = ssub.s32 256, 256
      %15 = vsyncadd [#allocation5], %s14
      %s17 = sshll.u32 [#allocation4], 4
      %s18 = int_to_ptr.vmem [resolvable:$true] %s17
      %20 = dma.hbm_to_vmem [thread:$0]  %s0, 256, %s18, [#allocation5]
    $region5: #{tpu_custom_call.1} parent=1 // pred_fallthru
      _
    // Predicated region
    $region6: #{tpu_custom_call.1} parent=1 // pred_check
      _
    $region7: #{tpu_custom_call.1} parent=1 // pred_check_branch
      %22 = sbr.rel (0) target = $region9
    $region8: #{tpu_custom_call.1} parent=1 // pred_region
      %23 = dma.done [#allocation5], 256
    $region9: #{tpu_custom_call.1} parent=1 // pred_fallthru
      _
    %p24 = scmp.eq.s32.totalorder 0, 0
    // Predicated region
    $region10: #{tpu_custom_call.1} parent=1 // pred_check
      %p25 = pneg %p24
    $region11: #{tpu_custom_call.1} parent=1 // pred_check_branch
      %27 = sbr.rel (%p25) target = $region13
    $region12: #{tpu_custom_call.1} parent=1 // pred_region
      %vm28 = vcmask 1024
      %29 = vst.msk [vmem:[#allocation2] sm:$0x3] %vm28, inf
      %30 = vst.msk [vmem:[#allocation3] sm:$0x3] %vm28, -inf
    $region13: #{tpu_custom_call.1} parent=1 // pred_fallthru
      _
    %v31 = vld [vmem:[#allocation4] sm:$0xff]
    %v32 = vld [vmem:[#allocation4 + $0x8] sm:$0xff]
    %v33 = vld [vmem:[#allocation2] sm:$0x3]
    %v36 = vcombine.high %v31, %v31
    %v38 = vunpack.c.l.s4 1983009808
    %v39 = vunpack.c.0.s8 %v38
    %v40 = vlaneseq
    %v41 = vshrl.u32 %v40, 7
    %v42 = vsub.s32 %v39, %v41
    %v43 = vrot.slane %v31, %v42
    %v45 = vunpack.c.l.s4 1983009808
    %v46 = vunpack.c.0.s8 %v45
    %v47 = vlaneseq
    %v48 = vshrl.u32 %v47, 7
    %v49 = vsub.s32 %v46, %v48
    %v50 = vrot.slane %v36, %v49
    %v51 = vcombine.high %v43, %v43
    %v52 = vcombine.high %v50, %v50
    %v53 = vcombine.high %v32, %v32
    %v55 = vunpack.c.l.s4 1983009808
    %v56 = vunpack.c.0.s8 %v55
    %v57 = vlaneseq
    %v58 = vshrl.u32 %v57, 7
    %v59 = vsub.s32 %v56, %v58
    %v60 = vrot.slane %v32, %v59
    %v62 = vunpack.c.l.s4 1983009808
    %v63 = vunpack.c.0.s8 %v62
    %v64 = vlaneseq
    %v65 = vshrl.u32 %v64, 7
    %v66 = vsub.s32 %v63, %v65
    %v67 = vrot.slane %v53, %v66
    %v68 = vcombine.high %v60, %v60
    %v69 = vcombine.high %v67, %v67
    %vm78 = vcmask 1041408
    %v79 = vsel %vm78, %v43, inf
    %v80 = vsel %vm78, %v51, inf
    %v81 = vsel %vm78, %v50, inf
    %v82 = vsel %vm78, %v52, inf
    %v83 = vsel %vm78, %v60, inf
    %v84 = vmin.f32 %v79, %v83
    %v85 = vsel %vm78, %v68, inf
    %v86 = vmin.f32 %v80, %v85
    %v87 = vsel %vm78, %v67, inf
    %v88 = vmin.f32 %v81, %v87
    %v89 = vsel %vm78, %v69, inf
    %v90 = vmin.f32 %v82, %v89
    %v91 = vmin.f32 %v84, %v86
    %v92 = vmin.f32 %v88, %v90
    %v93 = vmin.f32 %v91, %v92
    %94 = vmin.xlane.f32.xlu0 %v93
    %v95 = vpop.xlane.xlu0 %94
    %v96 = vmin.f32 %v33, %v95
    %vm97 = vcmask 1024
    %98 = vst.msk [vmem:[#allocation2] sm:$0x3] %vm97, %v96
    %v99 = vld [vmem:[#allocation3] sm:$0x3]
    %v100 = vsel %vm78, %v43, -inf
    %v101 = vsel %vm78, %v51, -inf
    %v102 = vsel %vm78, %v50, -inf
    %v103 = vsel %vm78, %v52, -inf
    %v104 = vsel %vm78, %v60, -inf
    %v105 = vmax.f32 %v100, %v104
    %v106 = vsel %vm78, %v68, -inf
    %v107 = vmax.f32 %v101, %v106
    %v108 = vsel %vm78, %v67, -inf
    %v109 = vmax.f32 %v102, %v108
    %v110 = vsel %vm78, %v69, -inf
    %v111 = vmax.f32 %v103, %v110
    %v112 = vmax.f32 %v105, %v107
    %v113 = vmax.f32 %v109, %v111
    %v114 = vmax.f32 %v112, %v113
    %115 = vmax.xlane.f32.xlu0 %v114
    %v116 = vpop.xlane.xlu0 %115
    %v117 = vmax.f32 %v99, %v116
    %118 = vst.msk [vmem:[#allocation3] sm:$0x3] %vm97, %v117
    // Predicated region
    $region14: #{tpu_custom_call.1} parent=1 // pred_check
      %p119 = pneg %p24
    $region15: #{tpu_custom_call.1} parent=1 // pred_check_branch
      %121 = sbr.rel (%p119) target = $region17
    $region16: #{tpu_custom_call.1} parent=1 // pred_region
      %v122 = vld [vmem:[#allocation2] sm:$0x3]
      %v123 = vsel %vm97, %v122, 0.0
      %v124 = vrot.slane %v123, 4
      %v125 = vadd.f32 %v123, %v124
      %v126 = vrot.slane %v125, 2
      %v127 = vadd.f32 %v125, %v126
      %v128 = vrot.slane %v127, 1
      %v129 = vadd.f32 %v127, %v128
      %v130 = vmul.f32 %v129, 0.5
      %vm131 = vcmask 0
      %132 = vst.msk [vmem:[#allocation7] sm:$0x1] %vm131, %v130
      %v133 = vld [vmem:[#allocation3] sm:$0x3]
      %v134 = vsel %vm97, %v133, 0.0
      %v135 = vrot.slane %v134, 4
      %v136 = vadd.f32 %v134, %v135
      %v137 = vrot.slane %v136, 2
      %v138 = vadd.f32 %v136, %v137
      %v139 = vrot.slane %v138, 1
      %v140 = vadd.f32 %v138, %v139
      %v141 = vmul.f32 %v140, 0.5
      %142 = vst.msk [vmem:[#allocation8] sm:$0x1] %vm131, %v141
    $region17: #{tpu_custom_call.1} parent=1 // pred_fallthru
      _
    // Predicated region
    $region18: #{tpu_custom_call.1} parent=1 // pred_check
      _
    $region19: #{tpu_custom_call.1} parent=1 // pred_check_branch
      %144 = sbr.rel (0) target = $region21
    $region20: #{tpu_custom_call.1} parent=1 // pred_region
      %s146 = ssub.s32 16, 16
      %147 = vsyncadd [#allocation6], %s146
      %s149 = sshll.u32 [#allocation7], 4
      %s150 = int_to_ptr.vmem [resolvable:$true] %s149
      %152 = dma.vmem_to_hbm [thread:$0]  %s150, 16, %s1, [#allocation6]
    $region21: #{tpu_custom_call.1} parent=1 // pred_fallthru
      _
    // Predicated region
    $region22: #{tpu_custom_call.1} parent=1 // pred_check
      _
    $region23: #{tpu_custom_call.1} parent=1 // pred_check_branch
      %154 = sbr.rel (0) target = $region25
    $region24: #{tpu_custom_call.1} parent=1 // pred_region
      %s156 = ssub.s32 16, 16
      %157 = vsyncadd [#allocation9], %s156
      %s159 = sshll.u32 [#allocation8], 4
      %s160 = int_to_ptr.vmem [resolvable:$true] %s159
      %162 = dma.vmem_to_hbm [thread:$0]  %s160, 16, %s2, [#allocation9]
    $region25: #{tpu_custom_call.1} parent=1 // pred_fallthru
      _
    // Predicated region
    $region26: #{tpu_custom_call.1} parent=1 // pred_check
      _
    $region27: #{tpu_custom_call.1} parent=1 // pred_check_branch
      %164 = sbr.rel (0) target = $region29
    $region28: #{tpu_custom_call.1} parent=1 // pred_region
      %165 = dma.done [#allocation6], 16
    $region29: #{tpu_custom_call.1} parent=1 // pred_fallthru
      _
    // Predicated region
    $region30: #{tpu_custom_call.1} parent=1 // pred_check
      _
    $region31: #{tpu_custom_call.1} parent=1 // pred_check_branch
      %167 = sbr.rel (0) target = $region33
    $region32: #{tpu_custom_call.1} parent=1 // pred_region
      %168 = dma.done [#allocation9], 16
    $region33: #{tpu_custom_call.1} parent=1 // pred_fallthru
      _
    %169 = vsyncpa [#allocation5], 1
    %170 = vsyncpa [#allocation6], 1
    %171 = vsyncpa [#allocation9], 1

</llo_original>
